<compile_context>
chip_gen: v6e
topology: v6e:2x2x1
jax: 0.10.0
libtpu: 0.0.40
codegen_flags: <defaults>
</compile_context>

<pallas_src>
import jax
import jax.numpy as jnp
import numpy as np
from jax.experimental import pallas as pl
from jax.experimental.pallas import tpu as pltpu


def _round_up(x, m):
    return ((x + m - 1) // m) * m


def _downsample_matmul_kernel(p_ref, w_ref, b_ref, o_ref, acc_ref):
    # Grid: (M tiles [parallel], K tiles [arbitrary / reduction]).
    k = pl.program_id(1)

    @pl.when(k == 0)
    def _():
        acc_ref[...] = jnp.zeros_like(acc_ref)

    acc_ref[...] += jnp.dot(p_ref[...], w_ref[...],
                            preferred_element_type=jnp.float32)

    @pl.when(k == pl.num_programs(1) - 1)
    def _():
        o_ref[...] = (acc_ref[...] + b_ref[...]).astype(o_ref.dtype)


def downsample_forward(x, weight_v, weight_g, bias, gamma, beta, *, tm=512):
    """x: [N, Cin, H, W] f32 (NCHW). weight_v: [Cout, Cin, 3, 3]. weight_g, bias,
    gamma, beta: [Cout]. Returns [N, Cout, Ho, Wo] (3x3 conv, stride 2, pad 1)."""
    N, Cin, H, W = x.shape
    Cout = weight_v.shape[0]
    Ho = (H + 2 - 3) // 2 + 1
    Wo = (W + 2 - 3) // 2 + 1
    M = N * Ho * Wo
    K = Cin * 9

    # ---- fold weight-norm + conv bias + gamma/beta affine into (w_eff, b_eff) ----
    # weight_norm(dim=0): w_hat = g * v / ||v||_(cin,kh,kw); y = gamma*(conv(x,w_hat)+b)+beta
    #   => conv with w_eff = gamma * w_hat, bias b_eff = gamma*b + beta  (exact reassociation)
    norm = jnp.sqrt(jnp.sum(weight_v * weight_v, axis=(1, 2, 3)))          # [Cout]
    scale = (weight_g * gamma) / norm                                      # [Cout]
    w_eff = weight_v * scale[:, None, None, None]                          # [Cout,Cin,3,3]
    b_eff = gamma * bias + beta                                            # [Cout]

    # matmul layout [K, Cout] with K index = (kh*3 + kw)*Cin + cin (matches patches below)
    w_mat = jnp.transpose(w_eff, (2, 3, 1, 0)).reshape(K, Cout)

    # ---- im2col in NHWC tap order (stride 2, kernel 3, pad 1) ----
    # TODO(synk): build the 9 taps in-kernel from the padded NHWC input (strided ref
    # slices) to avoid streaming ~9x the input bytes from HBM at large channel counts.
    x_nhwc = jnp.transpose(x, (0, 2, 3, 1))
    x_pad = jnp.pad(x_nhwc, ((0, 0), (1, 1), (1, 1), (0, 0)))
    taps = [x_pad[:, kh:kh + 2 * Ho:2, kw:kw + 2 * Wo:2, :]
            for kh in range(3) for kw in range(3)]                         # 9 x [N,Ho,Wo,Cin]
    patches = jnp.concatenate(taps, axis=-1).reshape(M, K)                 # [M, K]

    # ---- padding / tiling ----
    cout_pad = _round_up(Cout, 128)            # lane-dense output stores
    if K <= 1024:
        tk, k_pad = K, K                        # single K step (full-dim block)
    else:
        tk = 512
        k_pad = _round_up(K, tk)

    # Keep per-step VMEM footprint well under v7x's 64 MiB physical VMEM.
    def _footprint(tm_):
        # double-buffered patches + weights, output + accumulator + bias (f32)
        return 4 * (2 * tm_ * tk + 2 * tk * cout_pad + 3 * tm_ * cout_pad)

    while tm > 64 and _footprint(tm) > (40 << 20):
        tm //= 2
    tm_eff = min(tm, _round_up(M, 8))
    m_pad = _round_up(M, tm_eff)

    if m_pad != M or k_pad != K:
        patches = jnp.pad(patches, ((0, m_pad - M), (0, k_pad - K)))
    if k_pad != K or cout_pad != Cout:
        w_mat = jnp.pad(w_mat, ((0, k_pad - K), (0, cout_pad - Cout)))
    b_row = jnp.pad(b_eff.reshape(1, Cout), ((0, 0), (0, cout_pad - Cout)))

    grid = (m_pad // tm_eff, k_pad // tk)

    out_flat = pl.pallas_call(
        _downsample_matmul_kernel,
        out_shape=jax.ShapeDtypeStruct((m_pad, cout_pad), jnp.float32),
        grid_spec=pltpu.PrefetchScalarGridSpec(
            num_scalar_prefetch=0,
            grid=grid,
            in_specs=[
                pl.BlockSpec((tm_eff, tk), lambda i, k: (i, k)),       # patches tile
                pl.BlockSpec((tk, cout_pad), lambda i, k: (k, 0)),     # folded weights
                pl.BlockSpec((1, cout_pad), lambda i, k: (0, 0)),      # folded bias
            ],
            out_specs=pl.BlockSpec((tm_eff, cout_pad), lambda i, k: (i, 0)),
            scratch_shapes=[pltpu.VMEM((tm_eff, cout_pad), jnp.float32)],
        ),
        compiler_params=pltpu.CompilerParams(
            dimension_semantics=("parallel", "arbitrary"),
            vmem_limit_bytes=48 * 1024 * 1024,
        ),
    )(patches, w_mat, b_row)

    # [m_pad, cout_pad] -> valid rows/cols -> [N, Ho, Wo, Cout] -> NCHW
    out = out_flat[:M, :Cout].reshape(N, Ho, Wo, Cout).transpose(0, 3, 1, 2)
    return out


def _reference(x, weight_v, weight_g, bias, gamma, beta):
    # pure-JAX reference mirroring PyTorch NormConv2d semantics
    norm = jnp.sqrt(jnp.sum(weight_v * weight_v, axis=(1, 2, 3), keepdims=True))
    w_hat = weight_v * (weight_g[:, None, None, None] / norm)
    out = jax.lax.conv_general_dilated(
        x, w_hat, window_strides=(2, 2), padding=[(1, 1), (1, 1)],
        dimension_numbers=("NCHW", "OIHW", "NCHW"))
    out = out + bias[None, :, None, None]
    out = gamma[None, :, None, None] * out + beta[None, :, None, None]
    return out


if __name__ == "__main__":
    key = jax.random.PRNGKey(0)
    k_x, k_v, k_g, k_b, k_gm, k_bt = jax.random.split(key, 6)

    N, C, H, W = 2, 4, 16, 16       # Downsample(channels=4) -> Cout = Cin = 4
    Cout = C

    x = jax.random.normal(k_x, (N, C, H, W), dtype=jnp.float32)
    weight_v = jax.random.normal(k_v, (Cout, C, 3, 3), dtype=jnp.float32) * 0.2
    weight_g = jax.random.uniform(k_g, (Cout,), dtype=jnp.float32, minval=0.5, maxval=1.5)
    bias = jax.random.normal(k_b, (Cout,), dtype=jnp.float32) * 0.1
    gamma = jax.random.uniform(k_gm, (Cout,), dtype=jnp.float32, minval=0.5, maxval=1.5)
    beta = jax.random.normal(k_bt, (Cout,), dtype=jnp.float32) * 0.1

    out = downsample_forward(x, weight_v, weight_g, bias, gamma, beta)
    out = jax.block_until_ready(out)

    ref = jax.block_until_ready(_reference(x, weight_v, weight_g, bias, gamma, beta))
    assert out.shape == (N, Cout, H // 2, W // 2), out.shape
    np.testing.assert_allclose(np.asarray(out), np.asarray(ref), rtol=1e-4, atol=1e-4)

    print("KERNEL_OK")
</pallas_src>

<mosaic_0001>
module attributes {stable_mosaic.version = 11 : i64} {
  func.func @_downsample_matmul_kernel(%arg0: i32, %arg1: i32, %arg2: memref<128x36xf32, #tpu.memory_space<vmem>>, %arg3: memref<36x128xf32, #tpu.memory_space<vmem>>, %arg4: memref<1x128xf32, #tpu.memory_space<vmem>>, %arg5: memref<128x128xf32, #tpu.memory_space<vmem>>, %arg6: memref<128x128xf32, #tpu.memory_space<vmem>>) attributes {dimension_semantics = [#tpu.dimension_semantics<parallel>, #tpu.dimension_semantics<arbitrary>], iteration_bounds = array<i64: 1, 1>, scalar_prefetch = 0 : i64, scratch_operands = 1 : i64, tpu.core_type = #tpu.core_type<tc>, window_params = [{transform_indices = @transform_0, window_bounds = array<i64: 128, 36>}, {transform_indices = @transform_1, window_bounds = array<i64: 36, 128>}, {pipeline_mode = #tpu.pipeline_mode<synchronous>, transform_indices = @transform_2, window_bounds = array<i64: 1, 128>}, {transform_indices = @transform_3, window_bounds = array<i64: 128, 128>}]} {
    %c0_i32 = arith.constant 0 : i32
    %0 = arith.cmpi eq, %arg1, %c0_i32 : i32
    %1 = arith.extui %0 : i1 to i32
    %c0_i32_0 = arith.constant 0 : i32
    %2 = arith.cmpi ne, %1, %c0_i32_0 : i32
    scf.if %2 {
      %cst_10 = arith.constant 0.000000e+00 : f32
      %12 = vector.broadcast %cst_10 : f32 to vector<128x128xf32>
      %c0_11 = arith.constant 0 : index
      %c0_12 = arith.constant 0 : index
      %13 = vector.load %arg6[%c0_11, %c0_12] : memref<128x128xf32, #tpu.memory_space<vmem>>, vector<128x128xf32>
      tpu.vector_store %arg6[%c0_11, %c0_12], %12 {strides = array<i32>} : memref<128x128xf32, #tpu.memory_space<vmem>>, vector<128x128xf32>,
    } else {
    }
    %c0 = arith.constant 0 : index
    %c0_1 = arith.constant 0 : index
    %3 = vector.load %arg6[%c0, %c0_1] : memref<128x128xf32, #tpu.memory_space<vmem>>, vector<128x128xf32>
    %c0_2 = arith.constant 0 : index
    %c0_3 = arith.constant 0 : index
    %4 = vector.load %arg2[%c0_2, %c0_3] : memref<128x36xf32, #tpu.memory_space<vmem>>, vector<128x36xf32>
    %c0_4 = arith.constant 0 : index
    %c0_5 = arith.constant 0 : index
    %5 = vector.load %arg3[%c0_4, %c0_5] : memref<36x128xf32, #tpu.memory_space<vmem>>, vector<36x128xf32>
    %cst = arith.constant dense<0.000000e+00> : vector<128x128xf32>
    %6 = tpu.matmul %4, %5, %cst {dimension_numbers = #tpu.dot_dimension_numbers<[1], [0], [0], [1], [0, 0, 1, 1], [], []>} : vector<128x36xf32>, vector<36x128xf32>, vector<128x128xf32> -> vector<128x128xf32>
    %7 = arith.addf %3, %6 : vector<128x128xf32>
    %c0_6 = arith.constant 0 : index
    %c0_7 = arith.constant 0 : index
    %8 = vector.load %arg6[%c0_6, %c0_7] : memref<128x128xf32, #tpu.memory_space<vmem>>, vector<128x128xf32>
    tpu.vector_store %arg6[%c0_6, %c0_7], %7 {strides = array<i32>} : memref<128x128xf32, #tpu.memory_space<vmem>>, vector<128x128xf32>,
    %c0_i32_8 = arith.constant 0 : i32
    %9 = arith.cmpi eq, %arg1, %c0_i32_8 : i32
    %10 = arith.extui %9 : i1 to i32
    %c0_i32_9 = arith.constant 0 : i32
    %11 = arith.cmpi ne, %10, %c0_i32_9 : i32
    scf.if %11 {
      %c0_10 = arith.constant 0 : index
      %c0_11 = arith.constant 0 : index
      %12 = vector.load %arg6[%c0_10, %c0_11] : memref<128x128xf32, #tpu.memory_space<vmem>>, vector<128x128xf32>
      %c0_12 = arith.constant 0 : index
      %c0_13 = arith.constant 0 : index
      %13 = vector.load %arg4[%c0_12, %c0_13] : memref<1x128xf32, #tpu.memory_space<vmem>>, vector<1x128xf32>
      %14 = vector.broadcast %13 : vector<1x128xf32> to vector<128x128xf32>
      %15 = arith.addf %12, %14 : vector<128x128xf32>
      %c0_14 = arith.constant 0 : index
      %c0_15 = arith.constant 0 : index
      %16 = vector.load %arg5[%c0_14, %c0_15] : memref<128x128xf32, #tpu.memory_space<vmem>>, vector<128x128xf32>
      tpu.vector_store %arg5[%c0_14, %c0_15], %15 {strides = array<i32>} : memref<128x128xf32, #tpu.memory_space<vmem>>, vector<128x128xf32>,
    } else {
    }
    return
  }
  func.func @transform_0(%arg0: i32, %arg1: i32) -> (i32, i32) {
    %c0_i32 = arith.constant 0 : i32
    return %arg0, %arg1 : i32, i32
  }
  func.func @transform_1(%arg0: i32, %arg1: i32) -> (i32, i32) {
    %c0_i32 = arith.constant 0 : i32
    %c0_i32_0 = arith.constant 0 : i32
    return %arg1, %c0_i32 : i32, i32
  }
  func.func @transform_2(%arg0: i32, %arg1: i32) -> (i32, i32) {
    %c0_i32 = arith.constant 0 : i32
    %c0_i32_0 = arith.constant 0 : i32
    %c0_i32_1 = arith.constant 0 : i32
    return %c0_i32, %c0_i32_0 : i32, i32
  }
  func.func @transform_3(%arg0: i32, %arg1: i32) -> (i32, i32) {
    %c0_i32 = arith.constant 0 : i32
    %c0_i32_0 = arith.constant 0 : i32
    return %arg0, %c0_i32 : i32, i32
  }
}

</mosaic_0001>

<llo_original>
// kernel: tpu_custom_call.1
$region0: #{tpu_custom_call.1}
  #allocation0 [shape = 'u32[]', space=smem, size = 0x4, offset = 0x4, fixed_abs, tag = 'smem constant byte address 0x4 - core index']
  #allocation1 [shape = 'u32[144,128]{1,0:T(1,128)}', space=vmem, size = 0x12000, scoped, tag = 'internal scratch']
  #allocation2 [shape = 'f32[128,128]{1,0:T(8,128)}', space=vmem, size = 0x10000, scoped, tag = 'scratch operand']
  %s0 = inlined_call_operand.vmem [shape: f32[128,36], index: 0, kind: input, shape index: {}]
  %s1 = inlined_call_operand.vmem [shape: f32[36,128], index: 1, kind: input, shape index: {}]
  %s2 = inlined_call_operand.vmem [shape: f32[1,128], index: 2, kind: input, shape index: {}]
  %s3 = inlined_call_operand.hbm [shape: f32[128,128], index: 3, kind: output, shape index: {}]
  %s4 = sld [smem:[#allocation0]]
  $region30: #{tpu_custom_call.1} parent=0
    _
  %s6 = ssub.s32 1, %s4
  %s7 = scalar_select 0, %s6, %s4
  $region1: #{tpu_custom_call.1} parent=0
    #allocation3 [shape = 'u8[65536]{0}', space=vmem, size = 0x10000, scoped, tag = 'output window, operand 0, single buffered']
    #allocation4 [shape = 's32[1]{0}', space=sflag, size = 0x4, scoped, tag = 'scoped memory for tpu_custom_call.1']
    %8 = vsyncpa [#allocation4], 0
    // Predicated region
    $region2: #{tpu_custom_call.1} parent=1 // pred_check
      _
    $region3: #{tpu_custom_call.1} parent=1 // pred_check_branch
      %10 = sbr.rel (0) target = $region5
    $region4: #{tpu_custom_call.1} parent=1 // pred_region
      _
    $region5: #{tpu_custom_call.1} parent=1 // pred_fallthru
      _
    // Predicated region
    $region6: #{tpu_custom_call.1} parent=1 // pred_check
      _
    $region7: #{tpu_custom_call.1} parent=1 // pred_check_branch
      %12 = sbr.rel (0) target = $region9
    $region8: #{tpu_custom_call.1} parent=1 // pred_region
      _
    $region9: #{tpu_custom_call.1} parent=1 // pred_fallthru
      _
    // Predicated region
    $region10: #{tpu_custom_call.1} parent=1 // pred_check
      _
    $region11: #{tpu_custom_call.1} parent=1 // pred_check_branch
      %14 = sbr.rel (0) target = $region13
    $region12: #{tpu_custom_call.1} parent=1 // pred_region
      _
    $region13: #{tpu_custom_call.1} parent=1 // pred_fallthru
      _
    %p15 = scmp.eq.s32.totalorder 0, 0
    // Predicated region
    $region14: #{tpu_custom_call.1} parent=1 // pred_check
      %p16 = pneg %p15
    $region15: #{tpu_custom_call.1} parent=1 // pred_check_branch
      %18 = sbr.rel (%p16) target = $region17
    $region16: #{tpu_custom_call.1} parent=1 // pred_region
      %19 = vst [vmem:[#allocation2] sm:$0xff] 0.0
      %20 = vst [vmem:[#allocation2 + $0x8] sm:$0xff] 0.0
      %21 = vst [vmem:[#allocation2 + $0x10] sm:$0xff] 0.0
      %22 = vst [vmem:[#allocation2 + $0x18] sm:$0xff] 0.0
      %23 = vst [vmem:[#allocation2 + $0x20] sm:$0xff] 0.0
      %24 = vst [vmem:[#allocation2 + $0x28] sm:$0xff] 0.0
      %25 = vst [vmem:[#allocation2 + $0x30] sm:$0xff] 0.0
      %26 = vst [vmem:[#allocation2 + $0x38] sm:$0xff] 0.0
      %27 = vst [vmem:[#allocation2 + $0x40] sm:$0xff] 0.0
      %28 = vst [vmem:[#allocation2 + $0x48] sm:$0xff] 0.0
      %29 = vst [vmem:[#allocation2 + $0x50] sm:$0xff] 0.0
      %30 = vst [vmem:[#allocation2 + $0x58] sm:$0xff] 0.0
      %31 = vst [vmem:[#allocation2 + $0x60] sm:$0xff] 0.0
      %32 = vst [vmem:[#allocation2 + $0x68] sm:$0xff] 0.0
      %33 = vst [vmem:[#allocation2 + $0x70] sm:$0xff] 0.0
      %34 = vst [vmem:[#allocation2 + $0x78] sm:$0xff] 0.0
    $region17: #{tpu_custom_call.1} parent=1 // pred_fallthru
      _
    %v35 = vld [vmem:[#allocation2] sm:$0xff]
    %v36 = vld [vmem:[#allocation2 + $0x8] sm:$0xff]
    %v37 = vld [vmem:[#allocation2 + $0x10] sm:$0xff]
    %v38 = vld [vmem:[#allocation2 + $0x18] sm:$0xff]
    %v39 = vld [vmem:[#allocation2 + $0x20] sm:$0xff]
    %v40 = vld [vmem:[#allocation2 + $0x28] sm:$0xff]
    %v41 = vld [vmem:[#allocation2 + $0x30] sm:$0xff]
    %v42 = vld [vmem:[#allocation2 + $0x38] sm:$0xff]
    %v43 = vld [vmem:[#allocation2 + $0x40] sm:$0xff]
    %v44 = vld [vmem:[#allocation2 + $0x48] sm:$0xff]
    %v45 = vld [vmem:[#allocation2 + $0x50] sm:$0xff]
    %v46 = vld [vmem:[#allocation2 + $0x58] sm:$0xff]
    %v47 = vld [vmem:[#allocation2 + $0x60] sm:$0xff]
    %v48 = vld [vmem:[#allocation2 + $0x68] sm:$0xff]
    %v49 = vld [vmem:[#allocation2 + $0x70] sm:$0xff]
    %v50 = vld [vmem:[#allocation2 + $0x78] sm:$0xff]
    %v51 = vld [vmem:[%s0] sm:$0xff]
    %v52 = vld [vmem:[%s0 + $0x8] sm:$0xff]
    %v53 = vld [vmem:[%s0 + $0x10] sm:$0xff]
    %v54 = vld [vmem:[%s0 + $0x18] sm:$0xff]
    %v55 = vld [vmem:[%s0 + $0x20] sm:$0xff]
    %v56 = vld [vmem:[%s0 + $0x28] sm:$0xff]
    %v57 = vld [vmem:[%s0 + $0x30] sm:$0xff]
    %v58 = vld [vmem:[%s0 + $0x38] sm:$0xff]
    %v59 = vld [vmem:[%s0 + $0x40] sm:$0xff]
    %v60 = vld [vmem:[%s0 + $0x48] sm:$0xff]
    %v61 = vld [vmem:[%s0 + $0x50] sm:$0xff]
    %v62 = vld [vmem:[%s0 + $0x58] sm:$0xff]
    %v63 = vld [vmem:[%s0 + $0x60] sm:$0xff]
    %v64 = vld [vmem:[%s0 + $0x68] sm:$0xff]
    %v65 = vld [vmem:[%s0 + $0x70] sm:$0xff]
    %v66 = vld [vmem:[%s0 + $0x78] sm:$0xff]
    %v67 = vld [vmem:[%s1] sm:$0xff]
    %v68 = vld [vmem:[%s1 + $0x8] sm:$0xff]
    %v69 = vld [vmem:[%s1 + $0x10] sm:$0xff]
    %v70 = vld [vmem:[%s1 + $0x18] sm:$0xff]
    %v71 = vld [vmem:[%s1 + $0x20] sm:$0xf]
    %vm72 = vcmask 293888
    %v74 = vsel %vm72, %v51, 0
    %v77 = vsel %vm72, %v52, 0
    %v80 = vsel %vm72, %v53, 0
    %v83 = vsel %vm72, %v54, 0
    %v86 = vsel %vm72, %v55, 0
    %v89 = vsel %vm72, %v56, 0
    %v92 = vsel %vm72, %v57, 0
    %v95 = vsel %vm72, %v58, 0
    %v98 = vsel %vm72, %v59, 0
    %v101 = vsel %vm72, %v60, 0
    %v104 = vsel %vm72, %v61, 0
    %v107 = vsel %vm72, %v62, 0
    %v110 = vsel %vm72, %v63, 0
    %v113 = vsel %vm72, %v64, 0
    %v116 = vsel %vm72, %v65, 0
    %v119 = vsel %vm72, %v66, 0
    %vm121 = vcmask 1043456
    %v123 = vsel %vm121, %v71, 0
    %125 = vmatprep.subr.mxu0 0.0
    %126 = vmatpush1.msra.mxu0 0.0
    %127 = vmatprep.subr.mxu0 0.0
    %128 = vmatpush1.msra.mxu0 0.0
    %129 = vmatprep.subr.mxu0 0.0
    %130 = vmatpush1.msra.mxu0 0.0
    %131 = vmatprep.subr.mxu0 0.0
    %132 = vmatpush1.msra.mxu0 0.0
    %133 = vmatprep.subr.mxu0 0.0
    %134 = vmatpush1.msra.mxu0 0.0
    %135 = vmatprep.subr.mxu0 0.0
    %136 = vmatpush1.msra.mxu0 0.0
    %137 = vmatprep.subr.mxu0 0.0
    %138 = vmatpush1.msra.mxu0 0.0
    %139 = vmatprep.subr.mxu0 0.0
    %140 = vmatpush1.msra.mxu0 0.0
    %141 = vmatprep.subr.mxu0 0.0
    %142 = vmatpush1.msra.mxu0 0.0
    %143 = vmatprep.subr.mxu0 0.0
    %144 = vmatpush1.msra.mxu0 0.0
    %145 = vmatprep.subr.mxu0 0.0
    %146 = vmatpush1.msra.mxu0 0.0
    %147 = vmatprep.subr.mxu0 0.0
    %148 = vmatpush1.msra.mxu0 %v123
    %149 = vmatprep.subr.mxu0 0.0
    %150 = vmatpush1.msra.mxu0 %v70
    %151 = vmatprep.subr.mxu0 0.0
    %152 = vmatpush1.msra.mxu0 %v69
    %153 = vmatprep.subr.mxu0 0.0
    %154 = vmatpush1.msra.mxu0 %v68
    %155 = vmatprep.subr.mxu0 0.0
    %156 = vmatpush1.msra.mxu0 %v67
    %157 = vmatprep.subr.mxu0 0.0
    %158 = vmatpush2.msra.mxu0 0.0
    %159 = vmatprep.subr.mxu0 0.0
    %160 = vmatpush2.msra.mxu0 0.0
    %161 = vmatprep.subr.mxu0 0.0
    %162 = vmatpush2.msra.mxu0 0.0
    %163 = vmatprep.subr.mxu0 0.0
    %164 = vmatpush2.msra.mxu0 0.0
    %165 = vmatprep.subr.mxu0 0.0
    %166 = vmatpush2.msra.mxu0 0.0
    %167 = vmatprep.subr.mxu0 0.0
    %168 = vmatpush2.msra.mxu0 0.0
    %169 = vmatprep.subr.mxu0 0.0
    %170 = vmatpush2.msra.mxu0 0.0
    %171 = vmatprep.subr.mxu0 0.0
    %172 = vmatpush2.msra.mxu0 0.0
    %173 = vmatprep.subr.mxu0 0.0
    %174 = vmatpush2.msra.mxu0 0.0
    %175 = vmatprep.subr.mxu0 0.0
    %176 = vmatpush2.msra.mxu0 0.0
    %177 = vmatprep.subr.mxu0 0.0
    %178 = vmatpush2.msra.mxu0 0.0
    %179 = vmatprep.subr.mxu0 0.0
    %180 = vmatpush2.msra.mxu0 0.0
    %181 = vmatprep.subr.mxu0 0.0
    %182 = vmatpush2.msra.mxu0 0.0
    %183 = vmatprep.subr.mxu0 0.0
    %184 = vmatpush2.msra.mxu0 0.0
    %185 = vmatprep.subr.mxu0 0.0
    %186 = vmatpush2.msra.mxu0 0.0
    %187 = vmatprep.subr.mxu0 0.0
    %188 = vmatpush2.msra.mxu0 0.0
    %189 = vmatprep.mubr.f32.mxu0 0.0
    %190 = vmatmul.mubr.f32.gmra.mxu0 %v74
    %v191 = vpop.f32.mrf.mxu0
    %v192 = vadd.f32 0.0, %v191
    %v193 = vpop.f32.mrf.mxu0
    %194 = vmatprep.mubr.f32.mxu0 0.0
    %195 = vmatmul.mubr.f32.gmra.mxu0 %v77
    %v196 = vpop.f32.mrf.mxu0
    %v197 = vadd.f32 0.0, %v196
    %v198 = vpop.f32.mrf.mxu0
    %199 = vmatprep.mubr.f32.mxu0 0.0
    %200 = vmatmul.mubr.f32.gmra.mxu0 %v80
    %v201 = vpop.f32.mrf.mxu0
    %v202 = vadd.f32 0.0, %v201
    %v203 = vpop.f32.mrf.mxu0
    %204 = vmatprep.mubr.f32.mxu0 0.0
    %205 = vmatmul.mubr.f32.gmra.mxu0 %v83
    %v206 = vpop.f32.mrf.mxu0
    %v207 = vadd.f32 0.0, %v206
    %v208 = vpop.f32.mrf.mxu0
    %209 = vmatprep.mubr.f32.mxu0 0.0
    %210 = vmatmul.mubr.f32.gmra.mxu0 %v86
    %v211 = vpop.f32.mrf.mxu0
    %v212 = vadd.f32 0.0, %v211
    %v213 = vpop.f32.mrf.mxu0
    %214 = vmatprep.mubr.f32.mxu0 0.0
    %215 = vmatmul.mubr.f32.gmra.mxu0 %v89
    %v216 = vpop.f32.mrf.mxu0
    %v217 = vadd.f32 0.0, %v216
    %v218 = vpop.f32.mrf.mxu0
    %219 = vmatprep.mubr.f32.mxu0 0.0
    %220 = vmatmul.mubr.f32.gmra.mxu0 %v92
    %v221 = vpop.f32.mrf.mxu0
    %v222 = vadd.f32 0.0, %v221
    %v223 = vpop.f32.mrf.mxu0
    %224 = vmatprep.mubr.f32.mxu0 0.0
    %225 = vmatmul.mubr.f32.gmra.mxu0 %v95
    %v226 = vpop.f32.mrf.mxu0
    %v227 = vadd.f32 0.0, %v226
    %v228 = vpop.f32.mrf.mxu0
    %229 = vmatprep.mubr.f32.mxu0 0.0
    %230 = vmatmul.mubr.f32.gmra.mxu0 %v98
    %v231 = vpop.f32.mrf.mxu0
    %v232 = vadd.f32 0.0, %v231
    %v233 = vpop.f32.mrf.mxu0
    %234 = vmatprep.mubr.f32.mxu0 0.0
    %235 = vmatmul.mubr.f32.gmra.mxu0 %v101
    %v236 = vpop.f32.mrf.mxu0
    %v237 = vadd.f32 0.0, %v236
    %v238 = vpop.f32.mrf.mxu0
    %239 = vmatprep.mubr.f32.mxu0 0.0
    %240 = vmatmul.mubr.f32.gmra.mxu0 %v104
    %v241 = vpop.f32.mrf.mxu0
    %v242 = vadd.f32 0.0, %v241
    %v243 = vpop.f32.mrf.mxu0
    %244 = vmatprep.mubr.f32.mxu0 0.0
    %245 = vmatmul.mubr.f32.gmra.mxu0 %v107
    %v246 = vpop.f32.mrf.mxu0
    %v247 = vadd.f32 0.0, %v246
    %v248 = vpop.f32.mrf.mxu0
    %249 = vmatprep.mubr.f32.mxu0 0.0
    %250 = vmatmul.mubr.f32.gmra.mxu0 %v110
    %v251 = vpop.f32.mrf.mxu0
    %v252 = vadd.f32 0.0, %v251
    %v253 = vpop.f32.mrf.mxu0
    %254 = vmatprep.mubr.f32.mxu0 0.0
    %255 = vmatmul.mubr.f32.gmra.mxu0 %v113
    %v256 = vpop.f32.mrf.mxu0
    %v257 = vadd.f32 0.0, %v256
    %v258 = vpop.f32.mrf.mxu0
    %259 = vmatprep.mubr.f32.mxu0 0.0
    %260 = vmatmul.mubr.f32.gmra.mxu0 %v116
    %v261 = vpop.f32.mrf.mxu0
    %v262 = vadd.f32 0.0, %v261
    %v263 = vpop.f32.mrf.mxu0
    %264 = vmatprep.mubr.f32.mxu0 0.0
    %265 = vmatmul.mubr.f32.gmra.mxu0 %v119
    %v266 = vpop.f32.mrf.mxu0
    %v267 = vadd.f32 0.0, %v266
    %v268 = vpop.f32.mrf.mxu0
    %269 = vdwg.mxu0
    %v270 = vadd.f32 %v35, %v192
    %v271 = vadd.f32 %v36, %v197
    %v272 = vadd.f32 %v37, %v202
    %v273 = vadd.f32 %v38, %v207
    %v274 = vadd.f32 %v39, %v212
    %v275 = vadd.f32 %v40, %v217
    %v276 = vadd.f32 %v41, %v222
    %v277 = vadd.f32 %v42, %v227
    %v278 = vadd.f32 %v43, %v232
    %v279 = vadd.f32 %v44, %v237
    %v280 = vadd.f32 %v45, %v242
    %v281 = vadd.f32 %v46, %v247
    %v282 = vadd.f32 %v47, %v252
    %v283 = vadd.f32 %v48, %v257
    %v284 = vadd.f32 %v49, %v262
    %v285 = vadd.f32 %v50, %v267
    %286 = vst [vmem:[#allocation2] sm:$0xff] %v270
    %287 = vst [vmem:[#allocation2 + $0x8] sm:$0xff] %v271
    %288 = vst [vmem:[#allocation2 + $0x10] sm:$0xff] %v272
    %289 = vst [vmem:[#allocation2 + $0x18] sm:$0xff] %v273
    %290 = vst [vmem:[#allocation2 + $0x20] sm:$0xff] %v274
    %291 = vst [vmem:[#allocation2 + $0x28] sm:$0xff] %v275
    %292 = vst [vmem:[#allocation2 + $0x30] sm:$0xff] %v276
    %293 = vst [vmem:[#allocation2 + $0x38] sm:$0xff] %v277
    %294 = vst [vmem:[#allocation2 + $0x40] sm:$0xff] %v278
    %295 = vst [vmem:[#allocation2 + $0x48] sm:$0xff] %v279
    %296 = vst [vmem:[#allocation2 + $0x50] sm:$0xff] %v280
    %297 = vst [vmem:[#allocation2 + $0x58] sm:$0xff] %v281
    %298 = vst [vmem:[#allocation2 + $0x60] sm:$0xff] %v282
    %299 = vst [vmem:[#allocation2 + $0x68] sm:$0xff] %v283
    %300 = vst [vmem:[#allocation2 + $0x70] sm:$0xff] %v284
    %301 = vst [vmem:[#allocation2 + $0x78] sm:$0xff] %v285
    // Predicated region
    $region18: #{tpu_custom_call.1} parent=1 // pred_check
      %p302 = pneg %p15
    $region19: #{tpu_custom_call.1} parent=1 // pred_check_branch
      %304 = sbr.rel (%p302) target = $region21
    $region20: #{tpu_custom_call.1} parent=1 // pred_region
      %v305 = vld [vmem:[#allocation2] sm:$0xff]
      %v306 = vld [vmem:[#allocation2 + $0x8] sm:$0xff]
      %v307 = vld [vmem:[#allocation2 + $0x10] sm:$0xff]
      %v308 = vld [vmem:[#allocation2 + $0x18] sm:$0xff]
      %v309 = vld [vmem:[#allocation2 + $0x20] sm:$0xff]
      %v310 = vld [vmem:[#allocation2 + $0x28] sm:$0xff]
      %v311 = vld [vmem:[#allocation2 + $0x30] sm:$0xff]
      %v312 = vld [vmem:[#allocation2 + $0x38] sm:$0xff]
      %v313 = vld [vmem:[#allocation2 + $0x40] sm:$0xff]
      %v314 = vld [vmem:[#allocation2 + $0x48] sm:$0xff]
      %v315 = vld [vmem:[#allocation2 + $0x50] sm:$0xff]
      %v316 = vld [vmem:[#allocation2 + $0x58] sm:$0xff]
      %v317 = vld [vmem:[#allocation2 + $0x60] sm:$0xff]
      %v318 = vld [vmem:[#allocation2 + $0x68] sm:$0xff]
      %v319 = vld [vmem:[#allocation2 + $0x70] sm:$0xff]
      %v320 = vld [vmem:[#allocation2 + $0x78] sm:$0xff]
      %v321 = vld [vmem:[%s2] sm:$0x1]
      %v323 = vlaneseq
      %v324 = vshrl.u32 %v323, 7
      %v325 = vsub.s32 0, %v324
      %v326 = vrot.slane %v321, %v325
      %v328 = vadd.f32 %v305, %v326
      %v329 = vadd.f32 %v306, %v326
      %v330 = vadd.f32 %v307, %v326
      %v331 = vadd.f32 %v308, %v326
      %v332 = vadd.f32 %v309, %v326
      %v333 = vadd.f32 %v310, %v326
      %v334 = vadd.f32 %v311, %v326
      %v335 = vadd.f32 %v312, %v326
      %v336 = vadd.f32 %v313, %v326
      %v337 = vadd.f32 %v314, %v326
      %v338 = vadd.f32 %v315, %v326
      %v339 = vadd.f32 %v316, %v326
      %v340 = vadd.f32 %v317, %v326
      %v341 = vadd.f32 %v318, %v326
      %v342 = vadd.f32 %v319, %v326
      %v343 = vadd.f32 %v320, %v326
      %344 = vst [vmem:[#allocation3] sm:$0xff] %v328
      %345 = vst [vmem:[#allocation3 + $0x8] sm:$0xff] %v329
      %346 = vst [vmem:[#allocation3 + $0x10] sm:$0xff] %v330
      %347 = vst [vmem:[#allocation3 + $0x18] sm:$0xff] %v331
      %348 = vst [vmem:[#allocation3 + $0x20] sm:$0xff] %v332
      %349 = vst [vmem:[#allocation3 + $0x28] sm:$0xff] %v333
      %350 = vst [vmem:[#allocation3 + $0x30] sm:$0xff] %v334
      %351 = vst [vmem:[#allocation3 + $0x38] sm:$0xff] %v335
      %352 = vst [vmem:[#allocation3 + $0x40] sm:$0xff] %v336
      %353 = vst [vmem:[#allocation3 + $0x48] sm:$0xff] %v337
      %354 = vst [vmem:[#allocation3 + $0x50] sm:$0xff] %v338
      %355 = vst [vmem:[#allocation3 + $0x58] sm:$0xff] %v339
      %356 = vst [vmem:[#allocation3 + $0x60] sm:$0xff] %v340
      %357 = vst [vmem:[#allocation3 + $0x68] sm:$0xff] %v341
      %358 = vst [vmem:[#allocation3 + $0x70] sm:$0xff] %v342
      %359 = vst [vmem:[#allocation3 + $0x78] sm:$0xff] %v343
    $region21: #{tpu_custom_call.1} parent=1 // pred_fallthru
      _
    // Predicated region
    $region22: #{tpu_custom_call.1} parent=1 // pred_check
      _
    $region23: #{tpu_custom_call.1} parent=1 // pred_check_branch
      %361 = sbr.rel (0) target = $region25
    $region24: #{tpu_custom_call.1} parent=1 // pred_region
      %s363 = ssub.s32 2048, 2048
      %364 = vsyncadd [#allocation4], %s363
      %s365 = sshll.u32 [#allocation3], 4
      %s366 = int_to_ptr.vmem [resolvable:$true] %s365
      %371 = dma.vmem_to_hbm [thread:$0]  %s366, 2048, %s3, [#allocation4], 128, 128, 8
    $region25: #{tpu_custom_call.1} parent=1 // pred_fallthru
      _
    // Predicated region
    $region26: #{tpu_custom_call.1} parent=1 // pred_check
      _
    $region27: #{tpu_custom_call.1} parent=1 // pred_check_branch
      %373 = sbr.rel (0) target = $region29
    $region28: #{tpu_custom_call.1} parent=1 // pred_region
      %374 = dma.done [#allocation4], 2048
    $region29: #{tpu_custom_call.1} parent=1 // pred_fallthru
      _
    %375 = vsyncpa [#allocation4], 1

</llo_original>
